<compile_context>
chip_gen: v7x
topology: tpu7x:2x2x1
jax: 0.10.0
libtpu: 0.0.40
codegen_flags: <defaults>
</compile_context>

<pallas_src>
import functools

import jax
import jax.numpy as jnp
from jax import lax
from jax.experimental import pallas as pl
from jax.experimental.pallas import tpu as pltpu


def _round_up(x, m):
    return (x + m - 1) // m * m


def _vmem_capacity_bytes():
    try:
        return int(pltpu.get_tpu_info().vmem_capacity_bytes)
    except Exception:
        return 128 << 20          # conservative default (v5e/v6e)


def _vmem_limit(needed):
    cap = _vmem_capacity_bytes()
    hard_cap = min(96 << 20, max(cap - (8 << 20), 16 << 20))   # <=56 MiB on v7x
    return int(min(max(needed, 16 << 20), hard_cap))


def _default_tile_n():
    # 256 on v7x (64 MiB VMEM / 2 TC), 512 on v5e/v6e (128 MiB VMEM).
    return 256 if _vmem_capacity_bytes() <= (64 << 20) else 512


def _tile_bytes(shape, dtype):
    itemsize = jnp.dtype(dtype).itemsize
    sublane = 8 if itemsize >= 4 else 8 * (4 // itemsize)   # 16 for bf16
    s = list(shape)
    s[-1] = _round_up(s[-1], 128)
    if len(s) >= 2:
        s[-2] = _round_up(s[-2], sublane)
    n = 1
    for d in s:
        n *= d
    return n * itemsize


def _layernorm(x, gamma, beta, n_valid, eps=1e-12):
    # Single pass: var = E[x^2] - mu^2, clamped >= 0 to avoid rsqrt(negative).
    # Padded hidden columns of `x` are exactly zero, so dividing by the number
    # of *valid* columns reproduces the un-padded statistics; padded gamma /
    # beta are zero, so padded output columns stay exactly zero.
    inv_n = 1.0 / n_valid
    s1 = jnp.sum(x, axis=-1, keepdims=True)
    s2 = jnp.sum(x * x, axis=-1, keepdims=True)
    mu = s1 * inv_n
    var = jnp.maximum(s2 * inv_n - mu * mu, 0.0)
    inv = lax.rsqrt(var + eps)
    return (x - mu) * inv * gamma + beta


def _gelu(x):
    # tanh approximation (EUP-friendly).
    # TODO(synk): HuggingFace BERT uses erf-based GELU (tiny numeric deviation).
    c = 0.7978845608028654
    return 0.5 * x * (1.0 + jnp.tanh(c * (x + 0.044715 * x * x * x)))


# ---------------------------------------------------------------------------
# Kernel 1: language branch, once per batch element.
#   lang = ((0.5/count) * mask^T) @ LN(GELU(emb @ W_lang + b))       (NP, H)
# ---------------------------------------------------------------------------
def lang_kernel(emb_ref, nps_t_ref, w_lang_ref, pbl_ref, lang_ref, *, h_valid):
    emb = emb_ref[0]                                               # (L, He) bf16
    h = jnp.dot(emb, w_lang_ref[...], preferred_element_type=jnp.float32)
    h = _gelu(h + pbl_ref[0:1, :])                                 # b_lang
    h = _layernorm(h, pbl_ref[1:2, :], pbl_ref[2:3, :], h_valid)   # (L, H) f32
    # mask already transposed + scaled by 0.5/count in the wrapper -> plain
    # (NP, L) @ (L, H) matmul, no transposed MXU operand, no per-row divide.
    pooled = jnp.dot(nps_t_ref[0], h.astype(jnp.bfloat16),
                     preferred_element_type=jnp.float32)           # (NP, H)
    lang_ref[0] = pooled.astype(jnp.bfloat16)


# ---------------------------------------------------------------------------
# Kernel 2: visual encoder + cross-modal scores, per (batch, N-tile).
#   img    = LN(feat @ W_feat + b) + LN(pos @ W_pos + b)            (tn, H)
#   scores = lang @ img^T                                           (NP, tn)
# (0.5 average factor was folded into `lang` by the wrapper.)
# ---------------------------------------------------------------------------
def visual_scores_kernel(lang_ref, feat_ref, pos_ref, w_feat_ref, pb_ref,
                         out_ref, *, h_valid):
    feat = feat_ref[0]                                             # (tn, F) bf16
    vf = jnp.dot(feat, w_feat_ref[...], preferred_element_type=jnp.float32)
    vf = _layernorm(vf + pb_ref[0:1, :], pb_ref[1:2, :], pb_ref[2:3, :], h_valid)

    # K=4 box projection as unrolled VPU broadcast-FMAs (no MXU pass).
    pos = pos_ref[0]                                               # (tn, 4) f32
    vp = pos[:, 0:1] * pb_ref[6:7, :]
    vp = vp + pos[:, 1:2] * pb_ref[7:8, :]
    vp = vp + pos[:, 2:3] * pb_ref[8:9, :]
    vp = vp + pos[:, 3:4] * pb_ref[9:10, :]
    vp = _layernorm(vp + pb_ref[3:4, :], pb_ref[4:5, :], pb_ref[5:6, :], h_valid)

    img = (vf + vp).astype(jnp.bfloat16)                           # (tn, H)

    scores = lax.dot_general(
        lang_ref[0], img, (((1,), (1,)), ((), ())),
        preferred_element_type=jnp.float32)                        # (NP, tn)
    out_ref[0] = scores


def panoptic_narrative_grounding(emb, noun_phrases, feat, pos, params, *, tn=None):
    """emb: (B, L, He) f32, noun_phrases: (B, L, NP) f32,
       feat: (B, 2, O, F) f32, pos: (B, 2, O, 4) f32 -> (B, NP, 2*O) f32."""
    B, L, He = emb.shape
    _, _, NP = noun_phrases.shape
    _, two, O, F = feat.shape
    N = two * O
    H = params["w_lang"].shape[1]

    if tn is None:
        tn = _default_tile_n()
    tn = max(128, min(_round_up(tn, 128), _round_up(N, 128)))

    # bf16 operands pad second-to-last dims to 16 sublanes, lanes to 128.
    L_p = _round_up(L, 16)
    NP_p = _round_up(NP, 16)
    He_p = _round_up(He, 128)
    H_p = _round_up(H, 128)
    F_p = _round_up(F, 128)
    N_p = _round_up(N, tn)

    # ---- zero-pad and cast matmul operands to bf16 (f32 math stays in-kernel)
    emb_p = jnp.zeros((B, L_p, He_p), jnp.bfloat16
                      ).at[:, :L, :He].set(emb.astype(jnp.bfloat16))

    # pre-transpose mask and fold 0.5 (visual average) and 1/count (mean pool)
    counts = jnp.sum(noun_phrases, axis=1)                         # (B, NP)
    scale = 0.5 / jnp.maximum(counts, 1.0)                         # (B, NP)
    nps_t = jnp.swapaxes(noun_phrases, 1, 2) * scale[..., None]    # (B, NP, L)
    nps_t_p = jnp.zeros((B, NP_p, L_p), jnp.bfloat16
                        ).at[:, :NP, :L].set(nps_t.astype(jnp.bfloat16))

    feat_p = jnp.zeros((B, N_p, F_p), jnp.bfloat16
                       ).at[:, :N, :F].set(feat.reshape(B, N, F).astype(jnp.bfloat16))
    pos_p = jnp.zeros((B, N_p, 4), jnp.float32).at[:, :N, :].set(pos.reshape(B, N, 4))

    # ---- weights: bf16 matmul weights, packed f32 parameter blocks ----
    w_lang_p = jnp.zeros((He_p, H_p), jnp.bfloat16
                         ).at[:He, :H].set(params["w_lang"].astype(jnp.bfloat16))
    w_feat_p = jnp.zeros((F_p, H_p), jnp.bfloat16
                         ).at[:F, :H].set(params["w_feat"].astype(jnp.bfloat16))

    pbl = jnp.zeros((8, H_p), jnp.float32)                         # lang params
    for i, v in enumerate([params["b_lang"], params["g_lang"], params["be_lang"]]):
        pbl = pbl.at[i, :H].set(v.reshape(-1))

    pbv = jnp.zeros((16, H_p), jnp.float32)                        # visual params
    for i, v in enumerate([params["b_feat"], params["g_feat"], params["be_feat"],
                           params["b_pos"], params["g_pos"], params["be_pos"]]):
        pbv = pbv.at[i, :H].set(v.reshape(-1))
    pbv = pbv.at[6:10, :H].set(params["w_pos"])                    # w_pos rows

    h_valid = float(H)

    # ------------------ pass 1: language branch (grid over B) ------------------
    lang_streamed = [((1, L_p, He_p), jnp.bfloat16),
                     ((1, NP_p, L_p), jnp.bfloat16),
                     ((1, NP_p, H_p), jnp.bfloat16)]
    lang_const = [((He_p, H_p), jnp.bfloat16), ((8, H_p), jnp.float32)]
    lang_needed = (2 * sum(_tile_bytes(s, d) for s, d in lang_streamed)
                   + sum(_tile_bytes(s, d) for s, d in lang_const)
                   + 2 * L_p * H_p * 4                              # f32 intermediates
                   + (4 << 20))

    lang = pl.pallas_call(
        functools.partial(lang_kernel, h_valid=h_valid),
        out_shape=jax.ShapeDtypeStruct((B, NP_p, H_p), jnp.bfloat16),
        grid=(B,),
        in_specs=[
            pl.BlockSpec((1, L_p, He_p), lambda b: (b, 0, 0)),     # emb
            pl.BlockSpec((1, NP_p, L_p), lambda b: (b, 0, 0)),     # scaled mask^T
            pl.BlockSpec((He_p, H_p), lambda b: (0, 0)),           # w_lang (DMA once)
            pl.BlockSpec((8, H_p), lambda b: (0, 0)),              # packed lang params
        ],
        out_specs=pl.BlockSpec((1, NP_p, H_p), lambda b: (b, 0, 0)),
        compiler_params=pltpu.CompilerParams(
            dimension_semantics=("parallel",),
            vmem_limit_bytes=_vmem_limit(lang_needed)),
    )(emb_p, nps_t_p, w_lang_p, pbl)

    # ------------- pass 2: visual encoder + scores (grid over B, N tiles) ------
    n_tiles = N_p // tn
    main_streamed = [((1, NP_p, H_p), jnp.bfloat16),               # lang (per-b)
                     ((1, tn, F_p), jnp.bfloat16),
                     ((1, tn, 4), jnp.float32),
                     ((1, NP_p, tn), jnp.float32)]
    main_const = [((F_p, H_p), jnp.bfloat16), ((16, H_p), jnp.float32)]
    main_needed = (2 * sum(_tile_bytes(s, d) for s, d in main_streamed)
                   + sum(_tile_bytes(s, d) for s, d in main_const)
                   + 3 * tn * H_p * 4                               # f32 intermediates
                   + (4 << 20))

    out_p = pl.pallas_call(
        functools.partial(visual_scores_kernel, h_valid=h_valid),
        out_shape=jax.ShapeDtypeStruct((B, NP_p, N_p), jnp.float32),
        grid=(B, n_tiles),
        in_specs=[
            pl.BlockSpec((1, NP_p, H_p), lambda b, j: (b, 0, 0)),  # pooled lang
            pl.BlockSpec((1, tn, F_p), lambda b, j: (b, j, 0)),    # feat tile
            pl.BlockSpec((1, tn, 4), lambda b, j: (b, j, 0)),      # pos tile
            pl.BlockSpec((F_p, H_p), lambda b, j: (0, 0)),         # w_feat (DMA once)
            pl.BlockSpec((16, H_p), lambda b, j: (0, 0)),          # packed vis params
        ],
        out_specs=pl.BlockSpec((1, NP_p, tn), lambda b, j: (b, 0, j)),
        compiler_params=pltpu.CompilerParams(
            dimension_semantics=("parallel", "parallel"),
            vmem_limit_bytes=_vmem_limit(main_needed)),
    )(lang, feat_p, pos_p, w_feat_p, pbv)

    return out_p[:, :NP, :N]


def make_params(key, He, F, H):
    ks = jax.random.split(key, 3)
    scale = 0.02
    return {
        "w_lang": scale * jax.random.normal(ks[0], (He, H), jnp.float32),
        "b_lang": jnp.zeros((H,), jnp.float32),
        "g_lang": jnp.ones((H,), jnp.float32),
        "be_lang": jnp.zeros((H,), jnp.float32),
        "w_feat": scale * jax.random.normal(ks[1], (F, H), jnp.float32),
        "b_feat": jnp.zeros((H,), jnp.float32),
        "g_feat": jnp.ones((H,), jnp.float32),
        "be_feat": jnp.zeros((H,), jnp.float32),
        "w_pos": scale * jax.random.normal(ks[2], (4, H), jnp.float32),
        "b_pos": jnp.zeros((H,), jnp.float32),
        "g_pos": jnp.ones((H,), jnp.float32),
        "be_pos": jnp.zeros((H,), jnp.float32),
    }


def reference(emb, noun_phrases, feat, pos, params):
    """Pure-JAX f32 reference of the same forward (for a sanity check)."""
    H = params["w_lang"].shape[1]
    h = _gelu(emb @ params["w_lang"] + params["b_lang"])
    h = _layernorm(h, params["g_lang"], params["be_lang"], float(H))
    counts = jnp.maximum(jnp.sum(noun_phrases, axis=1), 1.0)        # (B, NP)
    pooled = jnp.einsum("blp,blh->bph", noun_phrases, h) / counts[..., None]
    B = feat.shape[0]
    feat_f = feat.reshape(B, -1, feat.shape[-1])
    pos_f = pos.reshape(B, -1, 4)
    vf = _layernorm(feat_f @ params["w_feat"] + params["b_feat"],
                    params["g_feat"], params["be_feat"], float(H))
    vp = _layernorm(pos_f @ params["w_pos"] + params["b_pos"],
                    params["g_pos"], params["be_pos"], float(H))
    img = 0.5 * (vf + vp)
    return jnp.einsum("bph,bnh->bpn", pooled, img)


if __name__ == "__main__":
    # Small, module-consistent shapes:
    #   feat: (b, 2, o, f), pos: (b, 2, o, 4), noun_phrases: (b, l, np)
    B, L, NP, O, F, He, H = 2, 8, 4, 8, 32, 32, 32
    VOCAB = 64

    key = jax.random.PRNGKey(0)
    k_tok, k_tab, k_feat, k_pos, k_np, k_par = jax.random.split(key, 6)

    # "sent": token ids -> embedding lookup (glue JAX, outside the kernel)
    tok_ids = jax.random.randint(k_tok, (B, L), 0, VOCAB)
    emb_table = 0.02 * jax.random.normal(k_tab, (VOCAB, He), jnp.float32)
    emb = jnp.take(emb_table, tok_ids, axis=0)                      # (B, L, He)

    feat = jax.random.normal(k_feat, (B, 2, O, F), jnp.float32)
    pos = jax.random.uniform(k_pos, (B, 2, O, 4), jnp.float32)
    noun_phrases = (jax.random.uniform(k_np, (B, L, NP)) > 0.5).astype(jnp.float32)

    params = make_params(k_par, He, F, H)

    out = panoptic_narrative_grounding(emb, noun_phrases, feat, pos, params)
    out = jax.block_until_ready(out)
    assert out.shape == (B, NP, 2 * O) and out.dtype == jnp.float32

    ref = reference(emb, noun_phrases, feat, pos, params)
    max_diff = float(jnp.max(jnp.abs(out - ref)))
    assert jnp.all(jnp.isfinite(out)), "non-finite output"
    # generous tolerance: MXU operands are bf16 in the kernel, reference is f32
    assert max_diff < 0.35, f"mismatch vs reference: max|diff|={max_diff}"

    print("KERNEL_OK")
</pallas_src>

<mosaic_0001>
module attributes {stable_mosaic.version = 11 : i64} {
  func.func @lang_kernel(%arg0: i32, %arg1: memref<1x16x128xbf16, #tpu.memory_space<vmem>>, %arg2: memref<1x16x16xbf16, #tpu.memory_space<vmem>>, %arg3: memref<128x128xbf16, #tpu.memory_space<vmem>>, %arg4: memref<8x128xf32, #tpu.memory_space<vmem>>, %arg5: memref<1x16x128xbf16, #tpu.memory_space<vmem>>) attributes {dimension_semantics = [#tpu.dimension_semantics<parallel>], iteration_bounds = array<i64: 2>, scalar_prefetch = 0 : i64, scratch_operands = 0 : i64, tpu.core_type = #tpu.core_type<tc>, window_params = [{transform_indices = @transform_0, window_bounds = array<i64: 1, 16, 128>}, {transform_indices = @transform_1, window_bounds = array<i64: 1, 16, 16>}, {pipeline_mode = #tpu.pipeline_mode<synchronous>, transform_indices = @transform_2, window_bounds = array<i64: 128, 128>}, {pipeline_mode = #tpu.pipeline_mode<synchronous>, transform_indices = @transform_3, window_bounds = array<i64: 8, 128>}, {transform_indices = @transform_4, window_bounds = array<i64: 1, 16, 128>}]} {
    %c0 = arith.constant 0 : index
    %c0_0 = arith.constant 0 : index
    %c0_1 = arith.constant 0 : index
    %0 = vector.load %arg1[%c0, %c0_0, %c0_1] : memref<1x16x128xbf16, #tpu.memory_space<vmem>>, vector<1x16x128xbf16>
    %1 = vector.shape_cast %0 : vector<1x16x128xbf16> to vector<16x128xbf16>
    %c0_2 = arith.constant 0 : index
    %c0_3 = arith.constant 0 : index
    %2 = vector.load %arg3[%c0_2, %c0_3] : memref<128x128xbf16, #tpu.memory_space<vmem>>, vector<128x128xbf16>
    %cst = arith.constant dense<0.000000e+00> : vector<16x128xf32>
    %3 = tpu.matmul %1, %2, %cst {dimension_numbers = #tpu.dot_dimension_numbers<[1], [0], [0], [1], [0, 0, 1, 1], [], []>} : vector<16x128xbf16>, vector<128x128xbf16>, vector<16x128xf32> -> vector<16x128xf32>
    %c0_4 = arith.constant 0 : index
    %c0_5 = arith.constant 0 : index
    %4 = vector.load %arg4[%c0_4, %c0_5] : memref<8x128xf32, #tpu.memory_space<vmem>>, vector<1x128xf32>
    %5 = vector.broadcast %4 : vector<1x128xf32> to vector<16x128xf32>
    %6 = arith.addf %3, %5 : vector<16x128xf32>
    %cst_6 = arith.constant 5.000000e-01 : f32
    %7 = vector.broadcast %cst_6 : f32 to vector<16x128xf32>
    %8 = arith.mulf %7, %6 : vector<16x128xf32>
    %cst_7 = arith.constant 4.471500e-02 : f32
    %9 = vector.broadcast %cst_7 : f32 to vector<16x128xf32>
    %10 = arith.mulf %9, %6 : vector<16x128xf32>
    %11 = arith.mulf %10, %6 : vector<16x128xf32>
    %12 = arith.mulf %11, %6 : vector<16x128xf32>
    %13 = arith.addf %6, %12 : vector<16x128xf32>
    %cst_8 = arith.constant 0.797884583 : f32
    %14 = vector.broadcast %cst_8 : f32 to vector<16x128xf32>
    %15 = arith.mulf %14, %13 : vector<16x128xf32>
    %16 = math.tanh %15 : vector<16x128xf32>
    %cst_9 = arith.constant 1.000000e+00 : f32
    %17 = vector.broadcast %cst_9 : f32 to vector<16x128xf32>
    %18 = arith.addf %17, %16 : vector<16x128xf32>
    %19 = arith.mulf %8, %18 : vector<16x128xf32>
    %c1 = arith.constant 1 : index
    %c0_10 = arith.constant 0 : index
    %20 = vector.load %arg4[%c1, %c0_10] : memref<8x128xf32, #tpu.memory_space<vmem>>, vector<1x128xf32>
    %c2 = arith.constant 2 : index
    %c0_11 = arith.constant 0 : index
    %21 = vector.load %arg4[%c2, %c0_11] : memref<8x128xf32, #tpu.memory_space<vmem>>, vector<1x128xf32>
    %cst_12 = arith.constant dense<0.000000e+00> : vector<16xf32>
    %22 = vector.multi_reduction <add>, %19, %cst_12 [1] : vector<16x128xf32> to vector<16xf32>
    %23 = vector.shape_cast %22 : vector<16xf32> to vector<16x1xf32>
    %24 = arith.mulf %19, %19 : vector<16x128xf32>
    %cst_13 = arith.constant dense<0.000000e+00> : vector<16xf32>
    %25 = vector.multi_reduction <add>, %24, %cst_13 [1] : vector<16x128xf32> to vector<16xf32>
    %26 = vector.shape_cast %25 : vector<16xf32> to vector<16x1xf32>
    %cst_14 = arith.constant 3.125000e-02 : f32
    %27 = vector.broadcast %cst_14 : f32 to vector<16x1xf32>
    %28 = arith.mulf %23, %27 : vector<16x1xf32>
    %cst_15 = arith.constant 3.125000e-02 : f32
    %29 = vector.broadcast %cst_15 : f32 to vector<16x1xf32>
    %30 = arith.mulf %26, %29 : vector<16x1xf32>
    %31 = arith.mulf %28, %28 : vector<16x1xf32>
    %32 = arith.subf %30, %31 : vector<16x1xf32>
    %cst_16 = arith.constant 0.000000e+00 : f32
    %33 = vector.broadcast %cst_16 : f32 to vector<16x1xf32>
    %34 = arith.maximumf %32, %33 : vector<16x1xf32>
    %cst_17 = arith.constant 9.99999996E-13 : f32
    %35 = vector.broadcast %cst_17 : f32 to vector<16x1xf32>
    %36 = arith.addf %34, %35 : vector<16x1xf32>
    %37 = math.rsqrt %36 : vector<16x1xf32>
    %38 = vector.broadcast %28 : vector<16x1xf32> to vector<16x128xf32>
    %39 = arith.subf %19, %38 : vector<16x128xf32>
    %40 = vector.broadcast %37 : vector<16x1xf32> to vector<16x128xf32>
    %41 = arith.mulf %39, %40 : vector<16x128xf32>
    %42 = vector.broadcast %20 : vector<1x128xf32> to vector<16x128xf32>
    %43 = arith.mulf %41, %42 : vector<16x128xf32>
    %44 = vector.broadcast %21 : vector<1x128xf32> to vector<16x128xf32>
    %45 = arith.addf %43, %44 : vector<16x128xf32>
    %c0_18 = arith.constant 0 : index
    %c0_19 = arith.constant 0 : index
    %c0_20 = arith.constant 0 : index
    %46 = vector.load %arg2[%c0_18, %c0_19, %c0_20] : memref<1x16x16xbf16, #tpu.memory_space<vmem>>, vector<1x16x16xbf16>
    %47 = vector.shape_cast %46 : vector<1x16x16xbf16> to vector<16x16xbf16>
    %48 = arith.truncf %45 : vector<16x128xf32> to vector<16x128xbf16>
    %cst_21 = arith.constant dense<0.000000e+00> : vector<16x128xf32>
    %49 = tpu.matmul %47, %48, %cst_21 {dimension_numbers = #tpu.dot_dimension_numbers<[1], [0], [0], [1], [0, 0, 1, 1], [], []>} : vector<16x16xbf16>, vector<16x128xbf16>, vector<16x128xf32> -> vector<16x128xf32>
    %50 = arith.truncf %49 : vector<16x128xf32> to vector<16x128xbf16>
    %c0_22 = arith.constant 0 : index
    %c0_23 = arith.constant 0 : index
    %c0_24 = arith.constant 0 : index
    %51 = vector.load %arg5[%c0_22, %c0_23, %c0_24] : memref<1x16x128xbf16, #tpu.memory_space<vmem>>, vector<1x16x128xbf16>
    %52 = vector.shape_cast %51 : vector<1x16x128xbf16> to vector<16x128xbf16>
    %53 = vector.shape_cast %50 : vector<16x128xbf16> to vector<1x16x128xbf16>
    tpu.vector_store %arg5[%c0_22, %c0_23, %c0_24], %53 {strides = array<i32>} : memref<1x16x128xbf16, #tpu.memory_space<vmem>>, vector<1x16x128xbf16>,
    return
  }
  func.func @transform_0(%arg0: i32) -> (i32, i32, i32) {
    %c0_i32 = arith.constant 0 : i32
    %c0_i32_0 = arith.constant 0 : i32
    %c0_i32_1 = arith.constant 0 : i32
    return %arg0, %c0_i32, %c0_i32_0 : i32, i32, i32
  }
  func.func @transform_1(%arg0: i32) -> (i32, i32, i32) {
    %c0_i32 = arith.constant 0 : i32
    %c0_i32_0 = arith.constant 0 : i32
    %c0_i32_1 = arith.constant 0 : i32
    return %arg0, %c0_i32, %c0_i32_0 : i32, i32, i32
  }
  func.func @transform_2(%arg0: i32) -> (i32, i32) {
    %c0_i32 = arith.constant 0 : i32
    %c0_i32_0 = arith.constant 0 : i32
    %c0_i32_1 = arith.constant 0 : i32
    return %c0_i32, %c0_i32_0 : i32, i32
  }
  func.func @transform_3(%arg0: i32) -> (i32, i32) {
    %c0_i32 = arith.constant 0 : i32
    %c0_i32_0 = arith.constant 0 : i32
    %c0_i32_1 = arith.constant 0 : i32
    return %c0_i32, %c0_i32_0 : i32, i32
  }
  func.func @transform_4(%arg0: i32) -> (i32, i32, i32) {
    %c0_i32 = arith.constant 0 : i32
    %c0_i32_0 = arith.constant 0 : i32
    %c0_i32_1 = arith.constant 0 : i32
    return %arg0, %c0_i32, %c0_i32_0 : i32, i32, i32
  }
}

</mosaic_0001>

<llo_original>
// kernel: tpu_custom_call.1
$region0: #{tpu_custom_call.1}
  #allocation0 [shape = 'u32[]', space=smem, size = 0x4, offset = 0x4, fixed_abs, tag = 'smem constant byte address 0x4 - core index']
  #allocation1 [shape = 'u32[144,128]{1,0:T(1,128)}', space=vmem, size = 0x12000, scoped, tag = 'internal scratch']
  %s0 = inlined_call_operand.hbm [shape: bf16[2,16,128], index: 0, kind: input, shape index: {}]
  %s1 = inlined_call_operand.hbm [shape: bf16[2,16,16], index: 1, kind: input, shape index: {}]
  %s2 = inlined_call_operand.hbm [shape: bf16[128,128], index: 2, kind: input, shape index: {}]
  %s3 = inlined_call_operand.vmem [shape: f32[8,128], index: 3, kind: input, shape index: {}]
  %s4 = inlined_call_operand.hbm [shape: bf16[2,16,128], index: 4, kind: output, shape index: {}]
  %s5 = sld [smem:[#allocation0]]
  $region61: #{tpu_custom_call.1} parent=0
    _
  %s7 = ssub.s32 1, %s5
  %s8 = scalar_select 0, %s7, %s5
  $region1: #{tpu_custom_call.1} parent=0
    #allocation2 [shape = 'u8[8192]{0}', space=vmem, size = 0x2000, scoped, tag = 'input window, operand 0']
    #allocation3 [shape = 's32[2]{0}', space=sflag, size = 0x8, scoped, tag = 'scoped memory for tpu_custom_call.1']
    #allocation4 [shape = 's32[2]{0}', space=sflag, size = 0x8, scoped, tag = 'scoped memory for tpu_custom_call.1']
    #allocation5 [shape = 'u8[8192]{0}', space=vmem, size = 0x2000, scoped, tag = 'input window, operand 1']
    #allocation6 [shape = 's32[2]{0}', space=sflag, size = 0x8, scoped, tag = 'scoped memory for tpu_custom_call.1']
    #allocation7 [shape = 'u8[32768]{0}', space=vmem, size = 0x8000, scoped, tag = 'input window, operand 2, single buffered']
    #allocation8 [shape = 'u8[8192]{0}', space=vmem, size = 0x2000, scoped, tag = 'output window, operand 0']
    %9 = vsyncpa [#allocation3], 0
    %s10 = scalar_lea.sflag [#allocation3], 1
    %11 = vsyncpa %s10, 0
    %12 = vsyncpa [#allocation6], 0
    %s13 = scalar_lea.sflag [#allocation6], 1
    %14 = vsyncpa %s13, 0
    %15 = vsyncpa [#allocation4], 0
    %s16 = scalar_lea.sflag [#allocation4], 1
    %17 = vsyncpa %s16, 0
    loop: start=0, step=1, limit=4
    $region2: #{tpu_custom_call.1} parent=1 // loop_pre_header
      _
    $region3: #{tpu_custom_call.1} parent=1 // loop_header
      %s19 = sphi 0, %s23
      %p20 = scmp.ge.s32.totalorder %s19, 4
      %s29 = sphi 0, %s31
      %s32 = sphi 0, %s29
      %s33 = sphi 0, %s32
      %s49 = sphi 0, %s33
      %s55 = sphi 0, %s57
      %s58 = sphi 0, %s55
      %s59 = sphi 0, %s58
      %s75 = sphi 0, %s59
      %s79 = sphi 0, %s79
      %s81 = sphi 0, %s79
      %s82 = sphi 0, %s81
      %s96 = sphi 0, %s82
      %s100 = sphi 0, %s100
      %s102 = sphi 0, %s100
      %s103 = sphi 0, %s102
      %s117 = sphi 0, %s103
      %s123 = sphi 0, %s125
      %s126 = sphi 0, %s123
      %s127 = sphi 0, %s126
      %s143 = sphi 0, %s127
    $region4: #{tpu_custom_call.1} parent=1 // loop_header_branch
      %22 = sbr.rel (%p20) target = $region8
    $region5: #{tpu_custom_call.1} parent=1 // loop_body
      %s24 = ssub.s32 %s19, 1
      %s25 = ssub.s32 %s19, 2
      %s26 = sadd.s32 %s19, 1
      %s27 = ssub.s32 %s19, %s26
      %p28 = scmp.eq.s32.totalorder %s27, 0
      %s30 = sadd.s32 %s29, 1
      %s31 = scalar_select %p28, %s29, %s30
      %p34 = pneg %p28
      %p35 = scmp.eq.s32.totalorder %s19, 1
      %p36 = por %p34, %p35
      %p37 = scmp.ne.s32.totalorder %s29, %s32
      %p38 = scmp.eq.s32.totalorder %s19, 0
      %p39 = por %p37, %p38
      %p40 = scmp.ne.s32.totalorder %s29, %s32
      %p41 = scmp.eq.s32.totalorder %s24, 1
      %p42 = por %p40, %p41
      %p43 = scmp.ne.s32.totalorder %s32, %s33
      %p44 = scmp.eq.s32.totalorder %s24, 0
      %p45 = por %p43, %p44
      %p46 = scmp.ne.s32.totalorder %s32, %s33
      %p47 = scmp.eq.s32.totalorder %s25, 1
      %p48 = por %p46, %p47
      %p50 = scmp.ne.s32.totalorder %s33, %s49
      %p51 = scmp.eq.s32.totalorder %s25, 0
      %p52 = por %p50, %p51
      %s53 = ssub.s32 %s19, %s26
      %p54 = scmp.eq.s32.totalorder %s53, 0
      %s56 = sadd.s32 %s55, 1
      %s57 = scalar_select %p54, %s55, %s56
      %p60 = pneg %p54
      %p61 = scmp.eq.s32.totalorder %s19, 1
      %p62 = por %p60, %p61
      %p63 = scmp.ne.s32.totalorder %s55, %s58
      %p64 = scmp.eq.s32.totalorder %s19, 0
      %p65 = por %p63, %p64
      %p66 = scmp.ne.s32.totalorder %s55, %s58
      %p67 = scmp.eq.s32.totalorder %s24, 1
      %p68 = por %p66, %p67
      %p69 = scmp.ne.s32.totalorder %s58, %s59
      %p70 = scmp.eq.s32.totalorder %s24, 0
      %p71 = por %p69, %p70
      %p72 = scmp.ne.s32.totalorder %s58, %s59
      %p73 = scmp.eq.s32.totalorder %s25, 1
      %p74 = por %p72, %p73
      %p76 = scmp.ne.s32.totalorder %s59, %s75
      %p77 = scmp.eq.s32.totalorder %s25, 0
      %p78 = por %p76, %p77
      %s80 = sadd.s32 %s79, 1
      %p83 = scmp.eq.s32.totalorder %s19, 1
      %p84 = scmp.ne.s32.totalorder %s79, %s81
      %p85 = scmp.eq.s32.totalorder %s19, 0
      %p86 = por %p84, %p85
      %p87 = scmp.ne.s32.totalorder %s79, %s81
      %p88 = scmp.eq.s32.totalorder %s24, 1
      %p89 = por %p87, %p88
      %p90 = scmp.ne.s32.totalorder %s81, %s82
      %p91 = scmp.eq.s32.totalorder %s24, 0
      %p92 = por %p90, %p91
      %p93 = scmp.ne.s32.totalorder %s81, %s82
      %p94 = scmp.eq.s32.totalorder %s25, 1
      %p95 = por %p93, %p94
      %p97 = scmp.ne.s32.totalorder %s82, %s96
      %p98 = scmp.eq.s32.totalorder %s25, 0
      %p99 = por %p97, %p98
      %s101 = sadd.s32 %s100, 1
      %p104 = scmp.eq.s32.totalorder %s19, 1
      %p105 = scmp.ne.s32.totalorder %s100, %s102
      %p106 = scmp.eq.s32.totalorder %s19, 0
      %p107 = por %p105, %p106
      %p108 = scmp.ne.s32.totalorder %s100, %s102
      %p109 = scmp.eq.s32.totalorder %s24, 1
      %p110 = por %p108, %p109
      %p111 = scmp.ne.s32.totalorder %s102, %s103
      %p112 = scmp.eq.s32.totalorder %s24, 0
      %p113 = por %p111, %p112
      %p114 = scmp.ne.s32.totalorder %s102, %s103
      %p115 = scmp.eq.s32.totalorder %s25, 1
      %p116 = por %p114, %p115
      %p118 = scmp.ne.s32.totalorder %s103, %s117
      %p119 = scmp.eq.s32.totalorder %s25, 0
      %p120 = por %p118, %p119
      %s121 = ssub.s32 %s19, %s26
      %p122 = scmp.eq.s32.totalorder %s121, 0
      %s124 = sadd.s32 %s123, 1
      %s125 = scalar_select %p122, %s123, %s124
      %p128 = pneg %p122
      %p129 = scmp.eq.s32.totalorder %s19, 1
      %p130 = por %p128, %p129
      %p131 = scmp.ne.s32.totalorder %s123, %s126
      %p132 = scmp.eq.s32.totalorder %s19, 0
      %p133 = por %p131, %p132
      %p134 = scmp.ne.s32.totalorder %s123, %s126
      %p135 = scmp.eq.s32.totalorder %s24, 1
      %p136 = por %p134, %p135
      %p137 = scmp.ne.s32.totalorder %s126, %s127
      %p138 = scmp.eq.s32.totalorder %s24, 0
      %p139 = por %p137, %p138
      %p140 = scmp.ne.s32.totalorder %s126, %s127
      %p141 = scmp.eq.s32.totalorder %s25, 1
      %p142 = por %p140, %p141
      %p144 = scmp.ne.s32.totalorder %s127, %s143
      %p145 = scmp.eq.s32.totalorder %s25, 0
      %p146 = por %p144, %p145
      %p147 = scmp.le.s32.totalorder 1, %s19
      %p148 = scmp.lt.s32.totalorder %s19, 3
      %p149 = pnand %p147, %p148
      %p150 = pneg %p149
      // Predicated region
      $region9: #{tpu_custom_call.1} parent=5 // pred_check
        _
      $region10: #{tpu_custom_call.1} parent=5 // pred_check_branch
        %152 = sbr.rel (%p149) target = $region12
      $region11: #{tpu_custom_call.1} parent=5 // pred_region
        %s153 = ssub.s32 %s19, 1
        // Predicated region
        $region13: #{tpu_custom_call.1} parent=11 // pred_check
          %p154 = pneg %p92
        $region14: #{tpu_custom_call.1} parent=11 // pred_check_branch
          %156 = sbr.rel (%p154) target = $region16
        $region15: #{tpu_custom_call.1} parent=11 // pred_region
          %s158 = ssub.s32 1024, 1024
          %159 = vsyncadd [#allocation6], %s158
          %s160 = sshll.u32 [#allocation7], 4
          %s161 = int_to_ptr.vmem [resolvable:$true] %s160
          %166 = dma.hbm_to_vmem [thread:$0]  %s2, 1024, %s161, [#allocation6], 64, 64, 4
        $region16: #{tpu_custom_call.1} parent=11 // pred_fallthru
          _
        // Predicated region
        $region17: #{tpu_custom_call.1} parent=11 // pred_check
          %p167 = pneg %p113
        $region18: #{tpu_custom_call.1} parent=11 // pred_check_branch
          %169 = sbr.rel (%p167) target = $region20
        $region19: #{tpu_custom_call.1} parent=11 // pred_region
          _
        $region20: #{tpu_custom_call.1} parent=11 // pred_fallthru
          _
      $region12: #{tpu_custom_call.1} parent=5 // pred_fallthru
        _
      %p170 = scmp.lt.s32.totalorder %s19, 2
      // Predicated region
      $region21: #{tpu_custom_call.1} parent=5 // pred_check
        %p171 = pneg %p170
      $region22: #{tpu_custom_call.1} parent=5 // pred_check_branch
        %173 = sbr.rel (%p171) target = $region24
      $region23: #{tpu_custom_call.1} parent=5 // pred_region
        // Predicated region
        $region25: #{tpu_custom_call.1} parent=23 // pred_check
          %p174 = pneg %p39
        $region26: #{tpu_custom_call.1} parent=23 // pred_check_branch
          %176 = sbr.rel (%p174) target = $region28
        $region27: #{tpu_custom_call.1} parent=23 // pred_region
          %s177 = sand.u32 %s29, 1
          %s178 = scalar_lea.sflag [#allocation3], %s177
          %s179 = sand.u32 %s29, 1
          %s180 = smul.addr %s179, 8
          %s181 = scalar_lea.vmem [#allocation2], %s180
          %s183 = ssub.s32 128, 128
          %184 = vsyncadd %s178, %s183
          %s185 = smul.addr %s19, 2
          %s186 = smul.addr %s185, 64
          %s187 = scalar_lea.hbm %s0, %s186
          %s188 = sshll.u32 %s181, 4
          %s189 = int_to_ptr.vmem [resolvable:$true] %s188
          %194 = dma.hbm_to_vmem [thread:$0]  %s187, 128, %s189, %s178, 64, 64, 4
        $region28: #{tpu_custom_call.1} parent=23 // pred_fallthru
          _
        // Predicated region
        $region29: #{tpu_custom_call.1} parent=23 // pred_check
          %p195 = pneg %p65
        $region30: #{tpu_custom_call.1} parent=23 // pred_check_branch
          %197 = sbr.rel (%p195) target = $region32
        $region31: #{tpu_custom_call.1} parent=23 // pred_region
          %s198 = sand.u32 %s19, 1
          %s199 = scalar_lea.sflag [#allocation6], %s198
          %s200 = sand.u32 %s55, 1
          %s201 = smul.addr %s200, 8
          %s202 = scalar_lea.vmem [#allocation5], %s201
          %s204 = ssub.s32 128, 128
          %205 = vsyncadd %s199, %s204
          %s206 = smul.addr %s19, 2
          %s207 = smul.addr %s206, 64
          %s208 = scalar_lea.hbm %s1, %s207
          %s209 = sshll.u32 %s202, 4
          %s210 = int_to_ptr.vmem [resolvable:$true] %s209
          %215 = dma.hbm_to_vmem [thread:$0]  %s208, 128, %s210, %s199, 64, 64, 4
        $region32: #{tpu_custom_call.1} parent=23 // pred_fallthru
          _
      $region24: #{tpu_custom_call.1} parent=5 // pred_fallthru
        _
      %p216 = scmp.le.s32.totalorder 1, %s19
      %p217 = scmp.lt.s32.totalorder %s19, 3
      %p218 = pnand %p216, %p217
      %p219 = pneg %p218
      // Predicated region
      $region33: #{tpu_custom_call.1} parent=5 // pred_check
        _
      $region34: #{tpu_custom_call.1} parent=5 // pred_check_branch
        %221 = sbr.rel (%p218) target = $region36
      $region35: #{tpu_custom_call.1} parent=5 // pred_region
        %s222 = ssub.s32 %s19, 1
        %s223 = sand.u32 %s32, 1
        %s224 = scalar_lea.sflag [#allocation3], %s223
        %s225 = sand.u32 %s32, 1
        %s226 = smul.addr %s225, 8
        %s227 = scalar_lea.vmem [#allocation2], %s226
        // Predicated region
        $region37: #{tpu_custom_call.1} parent=35 // pred_check
          %p228 = pneg %p45
        $region38: #{tpu_custom_call.1} parent=35 // pred_check_branch
          %230 = sbr.rel (%p228) target = $region40
        $region39: #{tpu_custom_call.1} parent=35 // pred_region
          %231 = dma.done %s224, 128
        $region40: #{tpu_custom_call.1} parent=35 // pred_fallthru
          _
        %s232 = sand.u32 %s24, 1
        %s233 = scalar_lea.sflag [#allocation6], %s232
        %s234 = sand.u32 %s58, 1
        %s235 = smul.addr %s234, 8
        %s236 = scalar_lea.vmem [#allocation5], %s235
        // Predicated region
        $region41: #{tpu_custom_call.1} parent=35 // pred_check
          %p237 = pneg %p71
        $region42: #{tpu_custom_call.1} parent=35 // pred_check_branch
          %239 = sbr.rel (%p237) target = $region44
        $region43: #{tpu_custom_call.1} parent=35 // pred_region
          %240 = dma.done %s233, 128
        $region44: #{tpu_custom_call.1} parent=35 // pred_fallthru
          _
        // Predicated region
        $region45: #{tpu_custom_call.1} parent=35 // pred_check
          %p241 = pneg %p92
        $region46: #{tpu_custom_call.1} parent=35 // pred_check_branch
          %243 = sbr.rel (%p241) target = $region48
        $region47: #{tpu_custom_call.1} parent=35 // pred_region
          %244 = dma.done [#allocation6], 1024
        $region48: #{tpu_custom_call.1} parent=35 // pred_fallthru
          _
        %s245 = sand.u32 %s32, 1
        %s246 = scalar_lea.sflag [#allocation3], %s245
        %s247 = sand.u32 %s32, 1
        %s248 = smul.addr %s247, 8
        %s249 = scalar_lea.vmem [#allocation2], %s248
        %p250 = pneg %p45
        %p251 = pneg %p42
        %s252 = sand.u32 %s24, 1
        %s253 = scalar_lea.sflag [#allocation6], %s252
        %s254 = sand.u32 %s58, 1
        %s255 = smul.addr %s254, 8
        %s256 = scalar_lea.vmem [#allocation5], %s255
        %p257 = pneg %p71
        %p258 = pneg %p68
        %p259 = pneg %p92
        %p260 = pneg %p89
        %p261 = pneg %p113
        %p262 = pneg %p110
        %p263 = pneg %p139
        %p264 = pneg %p136
        %s265 = sand.u32 %s126, 1
        %s266 = scalar_lea.sflag [#allocation4], %s265
        %s267 = sand.u32 %s126, 1
        %s268 = smul.addr %s267, 8
        %s269 = scalar_lea.vmem [#allocation8], %s268
        %v271 = vld [vmem:[%s227] sm:$0xf]
        %v272 = vld [vmem:[%s227 + $0x4] sm:$0xf]
        %v273 = vld [vmem:[#allocation7] sm:$0xf]
        %v274 = vld [vmem:[#allocation7 + $0x4] sm:$0xf]
        %v275 = vld [vmem:[#allocation7 + $0x8] sm:$0xf]
        %v276 = vld [vmem:[#allocation7 + $0xc] sm:$0xf]
        %v277 = vld [vmem:[#allocation7 + $0x10] sm:$0xf]
        %v278 = vld [vmem:[#allocation7 + $0x14] sm:$0xf]
        %v279 = vld [vmem:[#allocation7 + $0x18] sm:$0xf]
        %v280 = vld [vmem:[#allocation7 + $0x1c] sm:$0xf]
        %v281 = vld [vmem:[#allocation7 + $0x20] sm:$0xf]
        %v282 = vld [vmem:[#allocation7 + $0x24] sm:$0xf]
        %v283 = vld [vmem:[#allocation7 + $0x28] sm:$0xf]
        %v284 = vld [vmem:[#allocation7 + $0x2c] sm:$0xf]
        %v285 = vld [vmem:[#allocation7 + $0x30] sm:$0xf]
        %v286 = vld [vmem:[#allocation7 + $0x34] sm:$0xf]
        %v287 = vld [vmem:[#allocation7 + $0x38] sm:$0xf]
        %v288 = vld [vmem:[#allocation7 + $0x3c] sm:$0xf]
        %v289 = vld [vmem:[%s3] sm:$0x1]
        %v290 = vlaneseq
        %v291 = vshrl.u32 %v290, 7
        %v292 = vsub.s32 0, %v291
        %v293 = vrot.slane %v289, %v292
        %v296 = vunpack.c.l.b16 %v271
        %v297 = vunpack.c.l.b16 %v272
        %v298 = vpack.c.b16 %v297, %v296
        %v316 = vunpack.c.l.b16 %v273
        %v317 = vunpack.c.l.b16 %v274
        %v318 = vunpack.c.l.b16 %v275
        %v319 = vunpack.c.l.b16 %v276
        %v320 = vunpack.c.l.b16 %v277
        %v321 = vunpack.c.l.b16 %v278
        %v322 = vunpack.c.l.b16 %v279
        %v323 = vunpack.c.l.b16 %v280
        %v324 = vunpack.c.l.b16 %v281
        %v325 = vunpack.c.l.b16 %v282
        %v326 = vunpack.c.l.b16 %v283
        %v327 = vunpack.c.l.b16 %v284
        %v328 = vunpack.c.l.b16 %v285
        %v329 = vunpack.c.l.b16 %v286
        %v330 = vunpack.c.l.b16 %v287
        %v331 = vunpack.c.l.b16 %v288
        %v332 = vpack.c.b16 %v317, %v316
        %v333 = vpack.c.b16 %v319, %v318
        %v334 = vpack.c.b16 %v321, %v320
        %v335 = vpack.c.b16 %v323, %v322
        %v336 = vpack.c.b16 %v325, %v324
        %v337 = vpack.c.b16 %v327, %v326
        %v338 = vpack.c.b16 %v329, %v328
        %v339 = vpack.c.b16 %v331, %v330
        %348 = vmatprep.subr.bf16.mxu0 0
        %349 = vmatpush1.bf16.msra.mxu0 %v332
        %350 = vmatprep.subr.bf16.mxu0 0
        %351 = vmatpush1.bf16.msra.mxu0 %v333
        %352 = vmatprep.subr.bf16.mxu0 0
        %353 = vmatpush1.bf16.msra.mxu0 %v334
        %354 = vmatprep.subr.bf16.mxu0 0
        %355 = vmatpush1.bf16.msra.mxu0 %v335
        %356 = vmatprep.subr.bf16.mxu0 0
        %357 = vmatpush1.bf16.msra.mxu0 %v336
        %358 = vmatprep.subr.bf16.mxu0 0
        %359 = vmatpush1.bf16.msra.mxu0 %v337
        %360 = vmatprep.subr.bf16.mxu0 0
        %361 = vmatpush1.bf16.msra.mxu0 %v338
        %362 = vmatprep.subr.bf16.mxu0 0
        %363 = vmatpush1.bf16.msra.mxu0 %v339
        %364 = vmatprep.subr.bf16.mxu0 0
        %365 = vmatpush1.bf16.msra.mxu0 0
        %366 = vmatprep.subr.bf16.mxu0 0
        %367 = vmatpush1.bf16.msra.mxu0 0
        %368 = vmatprep.subr.bf16.mxu0 0
        %369 = vmatpush1.bf16.msra.mxu0 0
        %370 = vmatprep.subr.bf16.mxu0 0
        %371 = vmatpush1.bf16.msra.mxu0 0
        %372 = vmatprep.subr.bf16.mxu0 0
        %373 = vmatpush1.bf16.msra.mxu0 0
        %374 = vmatprep.subr.bf16.mxu0 0
        %375 = vmatpush1.bf16.msra.mxu0 0
        %376 = vmatprep.subr.bf16.mxu0 0
        %377 = vmatpush1.bf16.msra.mxu0 0
        %378 = vmatprep.subr.bf16.mxu0 0
        %379 = vmatpush1.bf16.msra.mxu0 0
        %380 = vmatprep.mubr.bf16.mxu0 0
        %381 = vmatmul.mubr.bf16.gmra.mrb[0].mxu0 %v298
        %v382 = vpop.f32.mrb[0].mxu0
        %v383 = vadd.f32 %v293, %v382
        %v384 = vpop.f32.mrb[0].mxu0
        %v385 = vpop.f32.mrb[0].mxu0
        %v386 = vadd.f32 %v293, %v385
        %v387 = vpop.f32.mrb[0].mxu0
        %388 = vdwg.mxu0
        %v389 = vmul.f32 %v383, 0.5
        %v390 = vmul.f32 %v386, 0.5
        %v391 = vmul.f32 %v383, 0.044715
        %v392 = vmul.f32 %v386, 0.044715
        %v393 = vmul.f32 %v391, %v383
        %v394 = vmul.f32 %v392, %v386
        %v395 = vmul.f32 %v393, %v383
        %v396 = vmul.f32 %v394, %v386
        %v397 = vadd.f32 %v383, %v395
        %v398 = vadd.f32 %v386, %v396
        %v399 = vmul.f32 %v397, 0.7978846
        %v400 = vmul.f32 %v398, 0.7978846
        %v401 = vtanh.pop %v399
        %v402 = vtanh.pop %v400
        %v403 = vadd.f32 %v401, 1.0
        %v404 = vadd.f32 %v402, 1.0
        %v405 = vmul.f32 %v389, %v403
        %v406 = vmul.f32 %v390, %v404
        %v407 = vld [vmem:[%s3 + $0x1] sm:$0x1]
        %v408 = vld [vmem:[%s3 + $0x2] sm:$0x1]
        %409 = vadd.xlane.f32.xlu0 %v405
        %v410 = vpop.xlane.xlu0 %409
        %411 = vadd.xlane.f32.xlu0 %v406
        %v412 = vpop.xlane.xlu0 %411
        %v413 = vmul.f32 %v405, %v405
        %v414 = vmul.f32 %v406, %v406
        %415 = vadd.xlane.f32.xlu0 %v413
        %v416 = vpop.xlane.xlu0 %415
        %417 = vadd.xlane.f32.xlu0 %v414
        %v418 = vpop.xlane.xlu0 %417
        %v419 = vmul.f32 %v410, 0.03125
        %v420 = vmul.f32 %v412, 0.03125
        %v421 = vmul.f32 %v416, 0.03125
        %v422 = vmul.f32 %v418, 0.03125
        %v423 = vmul.f32 %v419, %v419
        %v424 = vmul.f32 %v420, %v420
        %v425 = vsub.f32 %v421, %v423
        %v426 = vsub.f32 %v422, %v424
        %v427 = vmax.f32 %v425, 0.0
        %v428 = vmax.f32 %v426, 0.0
        %v429 = vadd.f32 %v427, 1e-12
        %v430 = vadd.f32 %v428, 1e-12
        %v431 = vrsqrt.pop %v429
        %v432 = vrsqrt.pop %v430
        %v433 = vsub.f32 %v405, %v419
        %v434 = vsub.f32 %v406, %v420
        %v435 = vmul.f32 %v433, %v431
        %v436 = vmul.f32 %v434, %v432
        %v437 = vlaneseq
        %v438 = vshrl.u32 %v437, 7
        %v439 = vsub.s32 0, %v438
        %v440 = vrot.slane %v407, %v439
        %v441 = vmul.f32 %v435, %v440
        %v442 = vmul.f32 %v436, %v440
        %v443 = vlaneseq
        %v444 = vshrl.u32 %v443, 7
        %v445 = vsub.s32 0, %v444
        %v446 = vrot.slane %v408, %v445
        %v447 = vadd.f32 %v441, %v446
        %v448 = vadd.f32 %v442, %v446
        %v449 = vld [vmem:[%s236] sm:$0xf]
        %v450 = vld [vmem:[%s236 + $0x4] sm:$0xf]
        %v451 = vpack.c.bf16 %v448, %v447
        %v454 = vunpack.c.l.b16 %v449
        %v455 = vunpack.c.l.b16 %v450
        %v456 = vpack.c.b16 %v455, %v454
        %vm457 = vcmask 130048
        %v459 = vsel %vm457, %v456, 0
        %461 = vmatprep.subr.bf16.mxu0 0
        %462 = vmatpush1.bf16.msra.mxu0 %v451
        %463 = vmatprep.subr.bf16.mxu0 0
        %464 = vmatpush1.bf16.msra.mxu0 0
        %465 = vmatprep.subr.bf16.mxu0 0
        %466 = vmatpush1.bf16.msra.mxu0 0
        %467 = vmatprep.subr.bf16.mxu0 0
        %468 = vmatpush1.bf16.msra.mxu0 0
        %469 = vmatprep.subr.bf16.mxu0 0
        %470 = vmatpush1.bf16.msra.mxu0 0
        %471 = vmatprep.subr.bf16.mxu0 0
        %472 = vmatpush1.bf16.msra.mxu0 0
        %473 = vmatprep.subr.bf16.mxu0 0
        %474 = vmatpush1.bf16.msra.mxu0 0
        %475 = vmatprep.subr.bf16.mxu0 0
        %476 = vmatpush1.bf16.msra.mxu0 0
        %477 = vmatprep.subr.bf16.mxu0 0
        %478 = vmatpush1.bf16.msra.mxu0 0
        %479 = vmatprep.subr.bf16.mxu0 0
        %480 = vmatpush1.bf16.msra.mxu0 0
        %481 = vmatprep.subr.bf16.mxu0 0
        %482 = vmatpush1.bf16.msra.mxu0 0
        %483 = vmatprep.subr.bf16.mxu0 0
        %484 = vmatpush1.bf16.msra.mxu0 0
        %485 = vmatprep.subr.bf16.mxu0 0
        %486 = vmatpush1.bf16.msra.mxu0 0
        %487 = vmatprep.subr.bf16.mxu0 0
        %488 = vmatpush1.bf16.msra.mxu0 0
        %489 = vmatprep.subr.bf16.mxu0 0
        %490 = vmatpush1.bf16.msra.mxu0 0
        %491 = vmatprep.subr.bf16.mxu0 0
        %492 = vmatpush1.bf16.msra.mxu0 0
        %493 = vmatprep.mubr.bf16.mxu0 0
        %494 = vmatmul.mubr.bf16.gmra.mrb[0].mxu0 %v459
        %v495 = vpop.f32.mrb[0].mxu0
        %v496 = vadd.f32 0.0, %v495
        %v497 = vpop.f32.mrb[0].mxu0
        %v498 = vpop.f32.mrb[0].mxu0
        %v499 = vadd.f32 0.0, %v498
        %v500 = vpop.f32.mrb[0].mxu0
        %501 = vdwg.mxu0
        %v502 = vpack.c.bf16 %v499, %v496
        %v504 = vunpack.c.l.b16 %v502
        %v505 = vunpack.c.h.b16 %v502
        %v506 = vpack.c.b16 %v504, %v504
        %v507 = vpack.c.b16 %v505, %v505
        %510 = vst [vmem:[%s269] sm:$0xf] %v506
        %511 = vst [vmem:[%s269 + $0x4] sm:$0xf] %v507
        %s512 = sand.u32 %s126, 1
        %s513 = scalar_lea.sflag [#allocation4], %s512
        %s514 = sand.u32 %s126, 1
        %s515 = smul.addr %s514, 8
        %s516 = scalar_lea.vmem [#allocation8], %s515
        // Predicated region
        $region49: #{tpu_custom_call.1} parent=35 // pred_check
          %p517 = pneg %p136
        $region50: #{tpu_custom_call.1} parent=35 // pred_check_branch
          %519 = sbr.rel (%p517) target = $region52
        $region51: #{tpu_custom_call.1} parent=35 // pred_region
          %s521 = ssub.s32 128, 128
          %522 = vsyncadd %s513, %s521
          %s523 = smul.addr %s24, 2
          %s524 = smul.addr %s523, 64
          %s525 = scalar_lea.hbm %s4, %s524
          %s526 = sshll.u32 %s516, 4
          %s527 = int_to_ptr.vmem [resolvable:$true] %s526
          %532 = dma.vmem_to_hbm [thread:$0]  %s527, 128, %s525, %s513, 64, 64, 4
        $region52: #{tpu_custom_call.1} parent=35 // pred_fallthru
          _
      $region36: #{tpu_custom_call.1} parent=5 // pred_fallthru
        _
      %p533 = scmp.le.s32.totalorder 2, %s19
      // Predicated region
      $region53: #{tpu_custom_call.1} parent=5 // pred_check
        %p534 = pneg %p533
      $region54: #{tpu_custom_call.1} parent=5 // pred_check_branch
        %536 = sbr.rel (%p534) target = $region56
      $region55: #{tpu_custom_call.1} parent=5 // pred_region
        %s537 = ssub.s32 %s19, 2
        // Predicated region
        $region57: #{tpu_custom_call.1} parent=55 // pred_check
          %p538 = pneg %p142
        $region58: #{tpu_custom_call.1} parent=55 // pred_check_branch
          %540 = sbr.rel (%p538) target = $region60
        $region59: #{tpu_custom_call.1} parent=55 // pred_region
          %s541 = sand.u32 %s127, 1
          %s542 = scalar_lea.sflag [#allocation4], %s541
          %s543 = sand.u32 %s127, 1
          %s544 = smul.addr %s543, 8
          %s545 = scalar_lea.vmem [#allocation8], %s544
          %546 = dma.done %s542, 128
        $region60: #{tpu_custom_call.1} parent=55 // pred_fallthru
          _
      $region56: #{tpu_custom_call.1} parent=5 // pred_fallthru
        _
    $region6: #{tpu_custom_call.1} parent=1 // loop_footer
      %s23 = sadd.s32 1, %s19
    $region7: #{tpu_custom_call.1} parent=1 // loop_footer_branch
      %18 = sbr.rel target = $region3
    $region8: #{tpu_custom_call.1} parent=1 // loop_exit
      _
    %547 = vsyncpa [#allocation3], 1
    %s548 = scalar_lea.sflag [#allocation3], 1
    %549 = vsyncpa %s548, 1
    %550 = vsyncpa [#allocation6], 1
    %s551 = scalar_lea.sflag [#allocation6], 1
    %552 = vsyncpa %s551, 1
    %553 = vsyncpa [#allocation4], 1
    %s554 = scalar_lea.sflag [#allocation4], 1
    %555 = vsyncpa %s554, 1

</llo_original>
